<compile_context>
chip_gen: v5e
topology: v5e:2x2
jax: 0.10.0
libtpu: 0.0.40
codegen_flags: <defaults>
</compile_context>

<pallas_src>
import math
import jax
import jax.numpy as jnp
from jax.experimental import pallas as pl
from jax.experimental.pallas import tpu as pltpu


_LANE = 128     # vreg lane width (last dim)
_SUBLANE = 8    # f32 sublane width (second-to-last dim)


def _round_up(n, m):
    return ((n + m - 1) // m) * m


def _pad_axis(a, axis, target):
    pad = target - a.shape[axis]
    if pad == 0:
        return a
    widths = [(0, 0)] * a.ndim
    widths[axis] = (0, pad)
    return jnp.pad(a, widths)


def mlp_block_kernel(x_ref, w1_ref, b1_ref, w2_ref, b2_ref, o_ref):
    # Resident operands loaded once per body (no inner loop -> no repeated broadcasts).
    w1 = w1_ref[...]            # (D_in, D_hid)  compute dtype (bf16 by default)
    w2 = w2_ref[...]            # (D_hid, D_out)
    b1 = b1_ref[...]            # (1, D_hid) f32
    b2 = b2_ref[...]            # (1, D_out) f32

    # FC1 on the MXU with f32 accumulation; bias add in f32.
    h = jnp.dot(x_ref[...].astype(w1.dtype), w1,
                preferred_element_type=jnp.float32) + b1

    # Exact (erf-based) GELU in f32 — matches nn.GELU default.
    h = 0.5 * h * (1.0 + jax.lax.erf(h * jnp.float32(1.0 / math.sqrt(2.0))))

    # FC2 on the MXU with f32 accumulation; bias add in f32.
    o = jnp.dot(h.astype(w2.dtype), w2,
                preferred_element_type=jnp.float32) + b2

    o_ref[...] = o.astype(o_ref.dtype)


def _resident_spec(shape, single_buffer):
    """BlockSpec for an operand that is identical at every grid step.

    Constant index_map -> fetched once; with pl.Buffered(1) only one VMEM buffer
    is allocated (no useless second pipeline buffer for ViT-size weights)."""
    index_map = lambda i: (0,) * len(shape)
    if single_buffer and hasattr(pl, "Buffered"):
        return pl.BlockSpec(shape, index_map, pipeline_mode=pl.Buffered(1))
    return pl.BlockSpec(shape, index_map)


def mlp_block(x, w1, b1, w2, b2, *, tm=256, compute_dtype=jnp.bfloat16):
    """ViT MLP block: GELU(x @ w1 + b1) @ w2 + b2.

    x:  (..., D_in);  w1: (D_in, D_hid) = FC1.weight.T;  b1: (D_hid,)
    w2: (D_hid, D_out) = FC2.weight.T;  b2: (D_out,)
    """
    *lead, D_in = x.shape
    D_hid = w1.shape[1]
    D_out = w2.shape[1]
    M = 1
    for d in lead:
        M *= d

    out_dtype = x.dtype
    wdtype = compute_dtype if compute_dtype is not None else w1.dtype

    # Lane-dense padding (exact: zero pads contribute nothing to either matmul).
    D_in_p = _round_up(D_in, _LANE)
    D_hid_p = _round_up(D_hid, _LANE)
    D_out_p = _round_up(D_out, _LANE)

    # Row tile: large by default; clamp so tiny inputs are not massively over-padded.
    tm_eff = min(tm, _round_up(M, _SUBLANE))
    M_p = _round_up(M, tm_eff)
    grid = (M_p // tm_eff,)

    x2 = _pad_axis(_pad_axis(x.reshape(M, D_in), 1, D_in_p), 0, M_p)
    w1p = _pad_axis(_pad_axis(w1, 0, D_in_p), 1, D_hid_p).astype(wdtype)
    w2p = _pad_axis(_pad_axis(w2, 0, D_hid_p), 1, D_out_p).astype(wdtype)
    b1p = _pad_axis(b1.reshape(1, D_hid), 1, D_hid_p).astype(jnp.float32)
    b2p = _pad_axis(b2.reshape(1, D_out), 1, D_out_p).astype(jnp.float32)

    cost = pl.CostEstimate(
        flops=2 * M_p * D_hid_p * (D_in_p + D_out_p),
        transcendentals=M_p * D_hid_p,
        bytes_accessed=(x2.size * x2.dtype.itemsize
                        + w1p.size * w1p.dtype.itemsize
                        + w2p.size * w2p.dtype.itemsize
                        + b1p.size * 4 + b2p.size * 4
                        + M_p * D_out_p * jnp.dtype(out_dtype).itemsize),
    )

    def run(single_buffer_weights):
        in_specs = [
            pl.BlockSpec((tm_eff, D_in_p), lambda i: (i, 0)),            # x row tile
            _resident_spec((D_in_p, D_hid_p), single_buffer_weights),    # W1 (resident)
            _resident_spec((1, D_hid_p), single_buffer_weights),         # b1
            _resident_spec((D_hid_p, D_out_p), single_buffer_weights),   # W2 (resident)
            _resident_spec((1, D_out_p), single_buffer_weights),         # b2
        ]
        return pl.pallas_call(
            mlp_block_kernel,
            out_shape=jax.ShapeDtypeStruct((M_p, D_out_p), out_dtype),
            grid_spec=pltpu.PrefetchScalarGridSpec(
                num_scalar_prefetch=0,
                grid=grid,
                in_specs=in_specs,
                out_specs=pl.BlockSpec((tm_eff, D_out_p), lambda i: (i, 0)),
            ),
            compiler_params=pltpu.CompilerParams(
                dimension_semantics=("parallel",),
                # Above v5e's 16 MiB default scoped limit, headroom under v7x's 64 MiB VMEM.
                vmem_limit_bytes=56 * 1024 * 1024,
            ),
            cost_estimate=cost,
        )(x2, w1p, b1p, w2p, b2p)

    try:
        out2 = run(True)        # single-buffered resident weights (preferred)
    except Exception:           # pl.Buffered(1) not supported by this JAX/Mosaic version
        out2 = run(False)

    return out2[:M, :D_out].reshape(*lead, D_out)


if __name__ == "__main__":
    # Small shapes consistent with a ViT MLP block.
    B, N = 2, 8            # batch, tokens
    D_in, D_hid, D_out = 32, 64, 32

    key = jax.random.PRNGKey(0)
    kx, kw1, kb1, kw2, kb2 = jax.random.split(key, 5)

    x = jax.random.normal(kx, (B, N, D_in), dtype=jnp.float32)
    lim1 = 1.0 / math.sqrt(D_in)
    w1 = jax.random.uniform(kw1, (D_in, D_hid), minval=-lim1, maxval=lim1, dtype=jnp.float32)
    b1 = jax.random.uniform(kb1, (D_hid,), minval=-lim1, maxval=lim1, dtype=jnp.float32)
    lim2 = 1.0 / math.sqrt(D_hid)
    w2 = jax.random.uniform(kw2, (D_hid, D_out), minval=-lim2, maxval=lim2, dtype=jnp.float32)
    b2 = jax.random.uniform(kb2, (D_out,), minval=-lim2, maxval=lim2, dtype=jnp.float32)

    out = jax.block_until_ready(mlp_block(x, w1, b1, w2, b2))
    assert out.shape == (B, N, D_out)

    # Pure-JAX reference with the same mixed precision as the kernel
    # (bf16 matmul inputs, f32 accumulation / bias / exact GELU).
    bf16 = jnp.bfloat16
    xf = x.reshape(-1, D_in)
    h = jnp.dot(xf.astype(bf16), w1.astype(bf16), preferred_element_type=jnp.float32) + b1
    h = jax.nn.gelu(h, approximate=False)
    ref = jnp.dot(h.astype(bf16), w2.astype(bf16), preferred_element_type=jnp.float32) + b2
    ref = ref.reshape(B, N, D_out).astype(out.dtype)

    assert jnp.allclose(out, ref, atol=2e-2, rtol=2e-2), "mismatch vs JAX reference"
    print("KERNEL_OK")
</pallas_src>

<mosaic_0001>
module attributes {stable_mosaic.version = 11 : i64} {
  func.func @mlp_block_kernel(%arg0: i32, %arg1: memref<16x128xf32, #tpu.memory_space<vmem>>, %arg2: memref<128x128xbf16, #tpu.memory_space<vmem>>, %arg3: memref<1x128xf32, #tpu.memory_space<vmem>>, %arg4: memref<128x128xbf16, #tpu.memory_space<vmem>>, %arg5: memref<1x128xf32, #tpu.memory_space<vmem>>, %arg6: memref<16x128xf32, #tpu.memory_space<vmem>>) attributes {dimension_semantics = [#tpu.dimension_semantics<parallel>], iteration_bounds = array<i64: 1>, scalar_prefetch = 0 : i64, scratch_operands = 0 : i64, tpu.core_type = #tpu.core_type<tc>, window_params = [{transform_indices = @transform_0, window_bounds = array<i64: 16, 128>}, {pipeline_mode = #tpu.pipeline_mode<synchronous>, transform_indices = @transform_1, window_bounds = array<i64: 128, 128>}, {pipeline_mode = #tpu.pipeline_mode<synchronous>, transform_indices = @transform_2, window_bounds = array<i64: 1, 128>}, {pipeline_mode = #tpu.pipeline_mode<synchronous>, transform_indices = @transform_3, window_bounds = array<i64: 128, 128>}, {pipeline_mode = #tpu.pipeline_mode<synchronous>, transform_indices = @transform_4, window_bounds = array<i64: 1, 128>}, {transform_indices = @transform_5, window_bounds = array<i64: 16, 128>}]} {
    %c0 = arith.constant 0 : index
    %c0_0 = arith.constant 0 : index
    %0 = vector.load %arg2[%c0, %c0_0] : memref<128x128xbf16, #tpu.memory_space<vmem>>, vector<128x128xbf16>
    %c0_1 = arith.constant 0 : index
    %c0_2 = arith.constant 0 : index
    %1 = vector.load %arg4[%c0_1, %c0_2] : memref<128x128xbf16, #tpu.memory_space<vmem>>, vector<128x128xbf16>
    %c0_3 = arith.constant 0 : index
    %c0_4 = arith.constant 0 : index
    %2 = vector.load %arg3[%c0_3, %c0_4] : memref<1x128xf32, #tpu.memory_space<vmem>>, vector<1x128xf32>
    %c0_5 = arith.constant 0 : index
    %c0_6 = arith.constant 0 : index
    %3 = vector.load %arg5[%c0_5, %c0_6] : memref<1x128xf32, #tpu.memory_space<vmem>>, vector<1x128xf32>
    %c0_7 = arith.constant 0 : index
    %c0_8 = arith.constant 0 : index
    %4 = vector.load %arg1[%c0_7, %c0_8] : memref<16x128xf32, #tpu.memory_space<vmem>>, vector<16x128xf32>
    %5 = arith.truncf %4 : vector<16x128xf32> to vector<16x128xbf16>
    %cst = arith.constant dense<0.000000e+00> : vector<16x128xf32>
    %6 = tpu.matmul %5, %0, %cst {dimension_numbers = #tpu.dot_dimension_numbers<[1], [0], [0], [1], [0, 0, 1, 1], [], []>} : vector<16x128xbf16>, vector<128x128xbf16>, vector<16x128xf32> -> vector<16x128xf32>
    %7 = vector.broadcast %2 : vector<1x128xf32> to vector<16x128xf32>
    %8 = arith.addf %6, %7 : vector<16x128xf32>
    %cst_9 = arith.constant 5.000000e-01 : f32
    %9 = vector.broadcast %cst_9 : f32 to vector<16x128xf32>
    %10 = arith.mulf %9, %8 : vector<16x128xf32>
    %cst_10 = arith.constant 0.707106769 : f32
    %11 = vector.broadcast %cst_10 : f32 to vector<16x128xf32>
    %12 = arith.mulf %8, %11 : vector<16x128xf32>
    %13 = math.erf %12 : vector<16x128xf32>
    %cst_11 = arith.constant 1.000000e+00 : f32
    %14 = vector.broadcast %cst_11 : f32 to vector<16x128xf32>
    %15 = arith.addf %14, %13 : vector<16x128xf32>
    %16 = arith.mulf %10, %15 : vector<16x128xf32>
    %17 = arith.truncf %16 : vector<16x128xf32> to vector<16x128xbf16>
    %cst_12 = arith.constant dense<0.000000e+00> : vector<16x128xf32>
    %18 = tpu.matmul %17, %1, %cst_12 {dimension_numbers = #tpu.dot_dimension_numbers<[1], [0], [0], [1], [0, 0, 1, 1], [], []>} : vector<16x128xbf16>, vector<128x128xbf16>, vector<16x128xf32> -> vector<16x128xf32>
    %19 = vector.broadcast %3 : vector<1x128xf32> to vector<16x128xf32>
    %20 = arith.addf %18, %19 : vector<16x128xf32>
    %c0_13 = arith.constant 0 : index
    %c0_14 = arith.constant 0 : index
    %21 = vector.load %arg6[%c0_13, %c0_14] : memref<16x128xf32, #tpu.memory_space<vmem>>, vector<16x128xf32>
    tpu.vector_store %arg6[%c0_13, %c0_14], %20 {strides = array<i32>} : memref<16x128xf32, #tpu.memory_space<vmem>>, vector<16x128xf32>,
    return
  }
  func.func @transform_0(%arg0: i32) -> (i32, i32) {
    %c0_i32 = arith.constant 0 : i32
    %c0_i32_0 = arith.constant 0 : i32
    return %arg0, %c0_i32 : i32, i32
  }
  func.func @transform_1(%arg0: i32) -> (i32, i32) {
    %c0_i32 = arith.constant 0 : i32
    %c0_i32_0 = arith.constant 0 : i32
    %c0_i32_1 = arith.constant 0 : i32
    return %c0_i32, %c0_i32_0 : i32, i32
  }
  func.func @transform_2(%arg0: i32) -> (i32, i32) {
    %c0_i32 = arith.constant 0 : i32
    %c0_i32_0 = arith.constant 0 : i32
    %c0_i32_1 = arith.constant 0 : i32
    return %c0_i32, %c0_i32_0 : i32, i32
  }
  func.func @transform_3(%arg0: i32) -> (i32, i32) {
    %c0_i32 = arith.constant 0 : i32
    %c0_i32_0 = arith.constant 0 : i32
    %c0_i32_1 = arith.constant 0 : i32
    return %c0_i32, %c0_i32_0 : i32, i32
  }
  func.func @transform_4(%arg0: i32) -> (i32, i32) {
    %c0_i32 = arith.constant 0 : i32
    %c0_i32_0 = arith.constant 0 : i32
    %c0_i32_1 = arith.constant 0 : i32
    return %c0_i32, %c0_i32_0 : i32, i32
  }
  func.func @transform_5(%arg0: i32) -> (i32, i32) {
    %c0_i32 = arith.constant 0 : i32
    %c0_i32_0 = arith.constant 0 : i32
    return %arg0, %c0_i32 : i32, i32
  }
}

module attributes {stable_mosaic.version = 11 : i64} {
  func.func @mlp_block_kernel(%arg0: i32, %arg1: memref<16x128xf32, #tpu.memory_space<vmem>>, %arg2: memref<128x128xbf16, #tpu.memory_space<vmem>>, %arg3: memref<1x128xf32, #tpu.memory_space<vmem>>, %arg4: memref<128x128xbf16, #tpu.memory_space<vmem>>, %arg5: memref<1x128xf32, #tpu.memory_space<vmem>>, %arg6: memref<16x128xf32, #tpu.memory_space<vmem>>) attributes {dimension_semantics = [#tpu.dimension_semantics<parallel>], iteration_bounds = array<i64: 1>, scalar_prefetch = 0 : i64, scratch_operands = 0 : i64, tpu.core_type = #tpu.core_type<tc>, window_params = [{transform_indices = @transform_0, window_bounds = array<i64: 16, 128>}, {pipeline_mode = #tpu.pipeline_mode<synchronous>, transform_indices = @transform_1, window_bounds = array<i64: 128, 128>}, {pipeline_mode = #tpu.pipeline_mode<synchronous>, transform_indices = @transform_2, window_bounds = array<i64: 1, 128>}, {pipeline_mode = #tpu.pipeline_mode<synchronous>, transform_indices = @transform_3, window_bounds = array<i64: 128, 128>}, {pipeline_mode = #tpu.pipeline_mode<synchronous>, transform_indices = @transform_4, window_bounds = array<i64: 1, 128>}, {transform_indices = @transform_5, window_bounds = array<i64: 16, 128>}]} {
    %c0 = arith.constant 0 : index
    %c0_0 = arith.constant 0 : index
    %0 = vector.load %arg2[%c0, %c0_0] : memref<128x128xbf16, #tpu.memory_space<vmem>>, vector<128x128xbf16>
    %c0_1 = arith.constant 0 : index
    %c0_2 = arith.constant 0 : index
    %1 = vector.load %arg4[%c0_1, %c0_2] : memref<128x128xbf16, #tpu.memory_space<vmem>>, vector<128x128xbf16>
    %c0_3 = arith.constant 0 : index
    %c0_4 = arith.constant 0 : index
    %2 = vector.load %arg3[%c0_3, %c0_4] : memref<1x128xf32, #tpu.memory_space<vmem>>, vector<1x128xf32>
    %c0_5 = arith.constant 0 : index
    %c0_6 = arith.constant 0 : index
    %3 = vector.load %arg5[%c0_5, %c0_6] : memref<1x128xf32, #tpu.memory_space<vmem>>, vector<1x128xf32>
    %c0_7 = arith.constant 0 : index
    %c0_8 = arith.constant 0 : index
    %4 = vector.load %arg1[%c0_7, %c0_8] : memref<16x128xf32, #tpu.memory_space<vmem>>, vector<16x128xf32>
    %5 = arith.truncf %4 : vector<16x128xf32> to vector<16x128xbf16>
    %cst = arith.constant dense<0.000000e+00> : vector<16x128xf32>
    %6 = tpu.matmul %5, %0, %cst {dimension_numbers = #tpu.dot_dimension_numbers<[1], [0], [0], [1], [0, 0, 1, 1], [], []>} : vector<16x128xbf16>, vector<128x128xbf16>, vector<16x128xf32> -> vector<16x128xf32>
    %7 = vector.broadcast %2 : vector<1x128xf32> to vector<16x128xf32>
    %8 = arith.addf %6, %7 : vector<16x128xf32>
    %cst_9 = arith.constant 5.000000e-01 : f32
    %9 = vector.broadcast %cst_9 : f32 to vector<16x128xf32>
    %10 = arith.mulf %9, %8 : vector<16x128xf32>
    %cst_10 = arith.constant 0.707106769 : f32
    %11 = vector.broadcast %cst_10 : f32 to vector<16x128xf32>
    %12 = arith.mulf %8, %11 : vector<16x128xf32>
    %13 = math.erf %12 : vector<16x128xf32>
    %cst_11 = arith.constant 1.000000e+00 : f32
    %14 = vector.broadcast %cst_11 : f32 to vector<16x128xf32>
    %15 = arith.addf %14, %13 : vector<16x128xf32>
    %16 = arith.mulf %10, %15 : vector<16x128xf32>
    %17 = arith.truncf %16 : vector<16x128xf32> to vector<16x128xbf16>
    %cst_12 = arith.constant dense<0.000000e+00> : vector<16x128xf32>
    %18 = tpu.matmul %17, %1, %cst_12 {dimension_numbers = #tpu.dot_dimension_numbers<[1], [0], [0], [1], [0, 0, 1, 1], [], []>} : vector<16x128xbf16>, vector<128x128xbf16>, vector<16x128xf32> -> vector<16x128xf32>
    %19 = vector.broadcast %3 : vector<1x128xf32> to vector<16x128xf32>
    %20 = arith.addf %18, %19 : vector<16x128xf32>
    %c0_13 = arith.constant 0 : index
    %c0_14 = arith.constant 0 : index
    %21 = vector.load %arg6[%c0_13, %c0_14] : memref<16x128xf32, #tpu.memory_space<vmem>>, vector<16x128xf32>
    tpu.vector_store %arg6[%c0_13, %c0_14], %20 {strides = array<i32>} : memref<16x128xf32, #tpu.memory_space<vmem>>, vector<16x128xf32>,
    return
  }
  func.func @transform_0(%arg0: i32) -> (i32, i32) {
    %c0_i32 = arith.constant 0 : i32
    %c0_i32_0 = arith.constant 0 : i32
    return %arg0, %c0_i32 : i32, i32
  }
  func.func @transform_1(%arg0: i32) -> (i32, i32) {
    %c0_i32 = arith.constant 0 : i32
    %c0_i32_0 = arith.constant 0 : i32
    %c0_i32_1 = arith.constant 0 : i32
    return %c0_i32, %c0_i32_0 : i32, i32
  }
  func.func @transform_2(%arg0: i32) -> (i32, i32) {
    %c0_i32 = arith.constant 0 : i32
    %c0_i32_0 = arith.constant 0 : i32
    %c0_i32_1 = arith.constant 0 : i32
    return %c0_i32, %c0_i32_0 : i32, i32
  }
  func.func @transform_3(%arg0: i32) -> (i32, i32) {
    %c0_i32 = arith.constant 0 : i32
    %c0_i32_0 = arith.constant 0 : i32
    %c0_i32_1 = arith.constant 0 : i32
    return %c0_i32, %c0_i32_0 : i32, i32
  }
  func.func @transform_4(%arg0: i32) -> (i32, i32) {
    %c0_i32 = arith.constant 0 : i32
    %c0_i32_0 = arith.constant 0 : i32
    %c0_i32_1 = arith.constant 0 : i32
    return %c0_i32, %c0_i32_0 : i32, i32
  }
  func.func @transform_5(%arg0: i32) -> (i32, i32) {
    %c0_i32 = arith.constant 0 : i32
    %c0_i32_0 = arith.constant 0 : i32
    return %arg0, %c0_i32 : i32, i32
  }
}

</mosaic_0001>

<llo_original>
// kernel: tpu_custom_call.1
$region0: #{tpu_custom_call.1}
  #allocation0 [shape = 'u32[]', space=smem, size = 0x4, offset = 0x4, fixed_abs, tag = 'smem constant byte address 0x4 - core index']
  #allocation1 [shape = 'u32[72,128]{1,0:T(1,128)}', space=vmem, size = 0x9000, scoped, tag = 'internal scratch']
  %s0 = inlined_call_operand.hbm [shape: f32[16,128], index: 0, kind: input, shape index: {}]
  %s1 = inlined_call_operand.hbm [shape: bf16[128,128], index: 1, kind: input, shape index: {}]
  %s2 = inlined_call_operand.vmem [shape: f32[1,128], index: 2, kind: input, shape index: {}]
  %s3 = inlined_call_operand.hbm [shape: bf16[128,128], index: 3, kind: input, shape index: {}]
  %s4 = inlined_call_operand.vmem [shape: f32[1,128], index: 4, kind: input, shape index: {}]
  %s5 = inlined_call_operand.hbm [shape: f32[16,128], index: 5, kind: output, shape index: {}]
  %s6 = sld [smem:[#allocation0]]
  $region42: #{tpu_custom_call.1} parent=0
    _
  %s8 = ssub.s32 1, %s6
  %s9 = scalar_select 0, %s8, %s6
  $region1: #{tpu_custom_call.1} parent=0
    #allocation2 [shape = 'u8[8192]{0}', space=vmem, size = 0x2000, scoped, tag = 'input window, operand 0, single buffered']
    #allocation3 [shape = 's32[1]{0}', space=sflag, size = 0x4, scoped, tag = 'scoped memory for tpu_custom_call.1']
    #allocation4 [shape = 's32[1]{0}', space=sflag, size = 0x4, scoped, tag = 'scoped memory for tpu_custom_call.1']
    #allocation5 [shape = 'u8[32768]{0}', space=vmem, size = 0x8000, scoped, tag = 'input window, operand 1, single buffered']
    #allocation6 [shape = 's32[1]{0}', space=sflag, size = 0x4, scoped, tag = 'scoped memory for tpu_custom_call.1']
    #allocation7 [shape = 'u8[32768]{0}', space=vmem, size = 0x8000, scoped, tag = 'input window, operand 3, single buffered']
    #allocation8 [shape = 'u8[8192]{0}', space=vmem, size = 0x2000, scoped, tag = 'output window, operand 0, single buffered']
    %10 = vsyncpa [#allocation3], 0
    %11 = vsyncpa [#allocation6], 0
    %12 = vsyncpa [#allocation4], 0
    // Predicated region
    $region2: #{tpu_custom_call.1} parent=1 // pred_check
      _
    $region3: #{tpu_custom_call.1} parent=1 // pred_check_branch
      %14 = sbr.rel (0) target = $region5
    $region4: #{tpu_custom_call.1} parent=1 // pred_region
      %16 = vsyncadd [#allocation3], 0
      %s17 = sshll.u32 %s0, 4
      %s18 = int_to_ptr.hbm [resolvable:$true] %s17
      %s19 = sshll.u32 [#allocation2], 4
      %s20 = int_to_ptr.vmem [resolvable:$true] %s19
      %25 = dma.hbm_to_vmem [thread:$0]  %s18, 256, %s20, [#allocation3], 128, 128, 8
    $region5: #{tpu_custom_call.1} parent=1 // pred_fallthru
      _
    // Predicated region
    $region6: #{tpu_custom_call.1} parent=1 // pred_check
      _
    $region7: #{tpu_custom_call.1} parent=1 // pred_check_branch
      %27 = sbr.rel (0) target = $region9
    $region8: #{tpu_custom_call.1} parent=1 // pred_region
      %29 = vsyncadd [#allocation6], 0
      %s30 = sshll.u32 %s1, 4
      %s31 = int_to_ptr.hbm [resolvable:$true] %s30
      %s32 = sshll.u32 [#allocation5], 4
      %s33 = int_to_ptr.vmem [resolvable:$true] %s32
      %38 = dma.hbm_to_vmem [thread:$0]  %s31, 1024, %s33, [#allocation6], 64, 64, 4
    $region9: #{tpu_custom_call.1} parent=1 // pred_fallthru
      _
    // Predicated region
    $region10: #{tpu_custom_call.1} parent=1 // pred_check
      _
    $region11: #{tpu_custom_call.1} parent=1 // pred_check_branch
      %40 = sbr.rel (0) target = $region13
    $region12: #{tpu_custom_call.1} parent=1 // pred_region
      _
    $region13: #{tpu_custom_call.1} parent=1 // pred_fallthru
      _
    // Predicated region
    $region14: #{tpu_custom_call.1} parent=1 // pred_check
      _
    $region15: #{tpu_custom_call.1} parent=1 // pred_check_branch
      %42 = sbr.rel (0) target = $region17
    $region16: #{tpu_custom_call.1} parent=1 // pred_region
      %44 = vsyncadd [#allocation6], 0
      %s45 = sshll.u32 %s3, 4
      %s46 = int_to_ptr.hbm [resolvable:$true] %s45
      %s47 = sshll.u32 [#allocation7], 4
      %s48 = int_to_ptr.vmem [resolvable:$true] %s47
      %53 = dma.hbm_to_vmem [thread:$0]  %s46, 1024, %s48, [#allocation6], 64, 64, 4
    $region17: #{tpu_custom_call.1} parent=1 // pred_fallthru
      _
    // Predicated region
    $region18: #{tpu_custom_call.1} parent=1 // pred_check
      _
    $region19: #{tpu_custom_call.1} parent=1 // pred_check_branch
      %55 = sbr.rel (0) target = $region21
    $region20: #{tpu_custom_call.1} parent=1 // pred_region
      _
    $region21: #{tpu_custom_call.1} parent=1 // pred_fallthru
      _
    // Predicated region
    $region22: #{tpu_custom_call.1} parent=1 // pred_check
      _
    $region23: #{tpu_custom_call.1} parent=1 // pred_check_branch
      %57 = sbr.rel (0) target = $region25
    $region24: #{tpu_custom_call.1} parent=1 // pred_region
      %59 = dma.done [#allocation3], 256
    $region25: #{tpu_custom_call.1} parent=1 // pred_fallthru
      _
    // Predicated region
    $region26: #{tpu_custom_call.1} parent=1 // pred_check
      _
    $region27: #{tpu_custom_call.1} parent=1 // pred_check_branch
      %61 = sbr.rel (0) target = $region29
    $region28: #{tpu_custom_call.1} parent=1 // pred_region
      %63 = dma.done [#allocation6], 1024
    $region29: #{tpu_custom_call.1} parent=1 // pred_fallthru
      _
    // Predicated region
    $region30: #{tpu_custom_call.1} parent=1 // pred_check
      _
    $region31: #{tpu_custom_call.1} parent=1 // pred_check_branch
      %65 = sbr.rel (0) target = $region33
    $region32: #{tpu_custom_call.1} parent=1 // pred_region
      %67 = dma.done [#allocation6], 1024
    $region33: #{tpu_custom_call.1} parent=1 // pred_fallthru
      _
    %v68 = vld [vmem:[#allocation5] sm:$0xf]
    %v69 = vld [vmem:[#allocation5 + $0x4] sm:$0xf]
    %v70 = vld [vmem:[#allocation5 + $0x8] sm:$0xf]
    %v71 = vld [vmem:[#allocation5 + $0xc] sm:$0xf]
    %v72 = vld [vmem:[#allocation5 + $0x10] sm:$0xf]
    %v73 = vld [vmem:[#allocation5 + $0x14] sm:$0xf]
    %v74 = vld [vmem:[#allocation5 + $0x18] sm:$0xf]
    %v75 = vld [vmem:[#allocation5 + $0x1c] sm:$0xf]
    %v76 = vld [vmem:[#allocation5 + $0x20] sm:$0xf]
    %v77 = vld [vmem:[#allocation5 + $0x24] sm:$0xf]
    %v78 = vld [vmem:[#allocation5 + $0x28] sm:$0xf]
    %v79 = vld [vmem:[#allocation5 + $0x2c] sm:$0xf]
    %v80 = vld [vmem:[#allocation5 + $0x30] sm:$0xf]
    %v81 = vld [vmem:[#allocation5 + $0x34] sm:$0xf]
    %v82 = vld [vmem:[#allocation5 + $0x38] sm:$0xf]
    %v83 = vld [vmem:[#allocation5 + $0x3c] sm:$0xf]
    %v84 = vld [vmem:[#allocation7] sm:$0xf]
    %v85 = vld [vmem:[#allocation7 + $0x4] sm:$0xf]
    %v86 = vld [vmem:[#allocation7 + $0x8] sm:$0xf]
    %v87 = vld [vmem:[#allocation7 + $0xc] sm:$0xf]
    %v88 = vld [vmem:[#allocation7 + $0x10] sm:$0xf]
    %v89 = vld [vmem:[#allocation7 + $0x14] sm:$0xf]
    %v90 = vld [vmem:[#allocation7 + $0x18] sm:$0xf]
    %v91 = vld [vmem:[#allocation7 + $0x1c] sm:$0xf]
    %v92 = vld [vmem:[#allocation7 + $0x20] sm:$0xf]
    %v93 = vld [vmem:[#allocation7 + $0x24] sm:$0xf]
    %v94 = vld [vmem:[#allocation7 + $0x28] sm:$0xf]
    %v95 = vld [vmem:[#allocation7 + $0x2c] sm:$0xf]
    %v96 = vld [vmem:[#allocation7 + $0x30] sm:$0xf]
    %v97 = vld [vmem:[#allocation7 + $0x34] sm:$0xf]
    %v98 = vld [vmem:[#allocation7 + $0x38] sm:$0xf]
    %v99 = vld [vmem:[#allocation7 + $0x3c] sm:$0xf]
    %v100 = vld [vmem:[%s2] sm:$0x1]
    %v101 = vld [vmem:[%s4] sm:$0x1]
    %v102 = vld [vmem:[#allocation2] sm:$0xff]
    %v103 = vld [vmem:[#allocation2 + $0x8] sm:$0xff]
    %v104 = vpack.c.bf16 %v103, %v102
    %v106 = vperm.slane %v100, 0
    %v124 = vunpack.c.l.b16 %v68
    %v125 = vunpack.c.l.b16 %v69
    %v126 = vunpack.c.l.b16 %v70
    %v127 = vunpack.c.l.b16 %v71
    %v128 = vunpack.c.l.b16 %v72
    %v129 = vunpack.c.l.b16 %v73
    %v130 = vunpack.c.l.b16 %v74
    %v131 = vunpack.c.l.b16 %v75
    %v132 = vunpack.c.l.b16 %v76
    %v133 = vunpack.c.l.b16 %v77
    %v134 = vunpack.c.l.b16 %v78
    %v135 = vunpack.c.l.b16 %v79
    %v136 = vunpack.c.l.b16 %v80
    %v137 = vunpack.c.l.b16 %v81
    %v138 = vunpack.c.l.b16 %v82
    %v139 = vunpack.c.l.b16 %v83
    %v140 = vpack.c.b16 %v125, %v124
    %v141 = vpack.c.b16 %v127, %v126
    %v142 = vpack.c.b16 %v129, %v128
    %v143 = vpack.c.b16 %v131, %v130
    %v144 = vpack.c.b16 %v133, %v132
    %v145 = vpack.c.b16 %v135, %v134
    %v146 = vpack.c.b16 %v137, %v136
    %v147 = vpack.c.b16 %v139, %v138
    %156 = vmatpush.bf16.msra.mxu0 %v147
    %157 = vmatpush.bf16.msra.mxu0 %v146
    %158 = vmatpush.bf16.msra.mxu0 %v145
    %159 = vmatpush.bf16.msra.mxu0 %v144
    %160 = vmatpush.bf16.msra.mxu0 %v143
    %161 = vmatpush.bf16.msra.mxu0 %v142
    %162 = vmatpush.bf16.msra.mxu0 %v141
    %163 = vmatpush.bf16.msra.mxu0 %v140
    %164 = vmatmul.bf16.gmra.mxu0 %v104
    %v165 = vpop.f32.mrf.mxu0
    %v166 = vadd.f32 %v106, %v165
    %v167 = vpop.f32.mrf.mxu0
    %v168 = vadd.f32 %v106, %v167
    %169 = vdwg.mxu0
    %v170 = vmul.f32 %v166, 0.5
    %v171 = vmul.f32 %v168, 0.5
    %v172 = vmul.f32 %v166, 0.70710677
    %v173 = vmul.f32 %v168, 0.70710677
    %v174 = vmul.f32 %v172, %v172
    %v175 = vmin.f32 16.0, %v174
    %v176 = vmul.f32 %v175, 2.1237322e-06
    %v177 = vadd.f32 %v176, 0.00028619796
    %v178 = vmul.f32 %v175, %v177
    %v179 = vadd.f32 %v178, 0.0036580483
    %v180 = vmul.f32 %v175, %v179
    %v181 = vadd.f32 %v180, 0.05243302
    %v182 = vmul.f32 %v175, %v181
    %v183 = vadd.f32 %v182, 0.18741608
    %v184 = vmul.f32 %v175, %v183
    %v185 = vadd.f32 %v184, 1.1283791
    %v186 = vmul.f32 %v172, %v185
    %v187 = vmul.f32 %v175, 3.8918573e-05
    %v188 = vadd.f32 %v187, 0.001143296
    %v189 = vmul.f32 %v175, %v188
    %v190 = vadd.f32 %v189, 0.014752088
    %v191 = vmul.f32 %v175, %v190
    %v192 = vadd.f32 %v191, 0.112945676
    %v193 = vmul.f32 %v175, %v192
    %v194 = vadd.f32 %v193, 0.4994258
    %v195 = vmul.f32 %v175, %v194
    %v196 = vadd.f32 %v195, 1.0
    %v197 = vrcp.pop %v196
    %v198 = vmul.f32 %v196, %v197
    %v199 = vsub.f32 1.0, %v198
    %v200 = vmul.f32 %v197, %v199
    %v201 = vadd.f32 %v197, %v200
    %vm202 = vweird.f32 %v196
    %vm203 = vweird.f32 %v197
    %vm204 = vmor %vm202, %vm203
    %v205 = vsel %vm204, %v197, %v201
    %v206 = vand.u32 2147483647, %v196
    %vm207 = vcmp.eq.f32.partialorder %v206, 8.507059e+37
    %v208 = vand.u32 %v196, 2147483648
    %v209 = vor.u32 1.1754944e-38, %v208
    %v210 = vsel %vm207, %v209, %v205
    %v211 = vmul.f32 %v186, %v210
    %v212 = vmin.f32 %v211, 1.0
    %v213 = vmax.f32 %v212, -1.0
    %v214 = vmul.f32 %v173, %v173
    %v215 = vmin.f32 16.0, %v214
    %v216 = vmul.f32 %v215, 2.1237322e-06
    %v217 = vadd.f32 %v216, 0.00028619796
    %v218 = vmul.f32 %v215, %v217
    %v219 = vadd.f32 %v218, 0.0036580483
    %v220 = vmul.f32 %v215, %v219
    %v221 = vadd.f32 %v220, 0.05243302
    %v222 = vmul.f32 %v215, %v221
    %v223 = vadd.f32 %v222, 0.18741608
    %v224 = vmul.f32 %v215, %v223
    %v225 = vadd.f32 %v224, 1.1283791
    %v226 = vmul.f32 %v173, %v225
    %v227 = vmul.f32 %v215, 3.8918573e-05
    %v228 = vadd.f32 %v227, 0.001143296
    %v229 = vmul.f32 %v215, %v228
    %v230 = vadd.f32 %v229, 0.014752088
    %v231 = vmul.f32 %v215, %v230
    %v232 = vadd.f32 %v231, 0.112945676
    %v233 = vmul.f32 %v215, %v232
    %v234 = vadd.f32 %v233, 0.4994258
    %v235 = vmul.f32 %v215, %v234
    %v236 = vadd.f32 %v235, 1.0
    %v237 = vrcp.pop %v236
    %v238 = vmul.f32 %v236, %v237
    %v239 = vsub.f32 1.0, %v238
    %v240 = vmul.f32 %v237, %v239
    %v241 = vadd.f32 %v237, %v240
    %vm242 = vweird.f32 %v236
    %vm243 = vweird.f32 %v237
    %vm244 = vmor %vm242, %vm243
    %v245 = vsel %vm244, %v237, %v241
    %v246 = vand.u32 2147483647, %v236
    %vm247 = vcmp.eq.f32.partialorder %v246, 8.507059e+37
    %v248 = vand.u32 %v236, 2147483648
    %v249 = vor.u32 1.1754944e-38, %v248
    %v250 = vsel %vm247, %v249, %v245
    %v251 = vmul.f32 %v226, %v250
    %v252 = vmin.f32 %v251, 1.0
    %v253 = vmax.f32 %v252, -1.0
    %v254 = vadd.f32 %v213, 1.0
    %v255 = vadd.f32 %v253, 1.0
    %v256 = vmul.f32 %v170, %v254
    %v257 = vmul.f32 %v171, %v255
    %v258 = vpack.c.bf16 %v257, %v256
    %v260 = vperm.slane %v101, 0
    %v278 = vunpack.c.l.b16 %v84
    %v279 = vunpack.c.l.b16 %v85
    %v280 = vunpack.c.l.b16 %v86
    %v281 = vunpack.c.l.b16 %v87
    %v282 = vunpack.c.l.b16 %v88
    %v283 = vunpack.c.l.b16 %v89
    %v284 = vunpack.c.l.b16 %v90
    %v285 = vunpack.c.l.b16 %v91
    %v286 = vunpack.c.l.b16 %v92
    %v287 = vunpack.c.l.b16 %v93
    %v288 = vunpack.c.l.b16 %v94
    %v289 = vunpack.c.l.b16 %v95
    %v290 = vunpack.c.l.b16 %v96
    %v291 = vunpack.c.l.b16 %v97
    %v292 = vunpack.c.l.b16 %v98
    %v293 = vunpack.c.l.b16 %v99
    %v294 = vpack.c.b16 %v279, %v278
    %v295 = vpack.c.b16 %v281, %v280
    %v296 = vpack.c.b16 %v283, %v282
    %v297 = vpack.c.b16 %v285, %v284
    %v298 = vpack.c.b16 %v287, %v286
    %v299 = vpack.c.b16 %v289, %v288
    %v300 = vpack.c.b16 %v291, %v290
    %v301 = vpack.c.b16 %v293, %v292
    %310 = vmatpush.bf16.msra.mxu0 %v301
    %311 = vmatpush.bf16.msra.mxu0 %v300
    %312 = vmatpush.bf16.msra.mxu0 %v299
    %313 = vmatpush.bf16.msra.mxu0 %v298
    %314 = vmatpush.bf16.msra.mxu0 %v297
    %315 = vmatpush.bf16.msra.mxu0 %v296
    %316 = vmatpush.bf16.msra.mxu0 %v295
    %317 = vmatpush.bf16.msra.mxu0 %v294
    %318 = vmatmul.bf16.gmra.mxu0 %v258
    %v319 = vpop.f32.mrf.mxu0
    %v320 = vadd.f32 %v260, %v319
    %v321 = vpop.f32.mrf.mxu0
    %v322 = vadd.f32 %v260, %v321
    %323 = vdwg.mxu0
    %324 = vst [vmem:[#allocation8] sm:$0xff] %v320
    %325 = vst [vmem:[#allocation8 + $0x8] sm:$0xff] %v322
    // Predicated region
    $region34: #{tpu_custom_call.1} parent=1 // pred_check
      _
    $region35: #{tpu_custom_call.1} parent=1 // pred_check_branch
      %327 = sbr.rel (0) target = $region37
    $region36: #{tpu_custom_call.1} parent=1 // pred_region
      %329 = vsyncadd [#allocation4], 0
      %s330 = sshll.u32 [#allocation8], 4
      %s331 = int_to_ptr.vmem [resolvable:$true] %s330
      %s332 = sshll.u32 %s5, 4
      %s333 = int_to_ptr.hbm [resolvable:$true] %s332
      %338 = dma.vmem_to_hbm [thread:$0]  %s331, 256, %s333, [#allocation4], 128, 128, 8
    $region37: #{tpu_custom_call.1} parent=1 // pred_fallthru
      _
    // Predicated region
    $region38: #{tpu_custom_call.1} parent=1 // pred_check
      _
    $region39: #{tpu_custom_call.1} parent=1 // pred_check_branch
      %340 = sbr.rel (0) target = $region41
    $region40: #{tpu_custom_call.1} parent=1 // pred_region
      %342 = dma.done [#allocation4], 256
    $region41: #{tpu_custom_call.1} parent=1 // pred_fallthru
      _
    %343 = vsyncpa [#allocation3], 1
    %344 = vsyncpa [#allocation6], 1
    %345 = vsyncpa [#allocation4], 1

// kernel: tpu_custom_call.1
$region0: #{tpu_custom_call.1}
  #allocation0 [shape = 'u32[]', space=smem, size = 0x4, offset = 0x4, fixed_abs, tag = 'smem constant byte address 0x4 - core index']
  #allocation1 [shape = 'u32[72,128]{1,0:T(1,128)}', space=vmem, size = 0x9000, scoped, tag = 'internal scratch']
  %s0 = inlined_call_operand.hbm [shape: f32[16,128], index: 0, kind: input, shape index: {}]
  %s1 = inlined_call_operand.hbm [shape: bf16[128,128], index: 1, kind: input, shape index: {}]
  %s2 = inlined_call_operand.vmem [shape: f32[1,128], index: 2, kind: input, shape index: {}]
  %s3 = inlined_call_operand.hbm [shape: bf16[128,128], index: 3, kind: input, shape index: {}]
  %s4 = inlined_call_operand.vmem [shape: f32[1,128], index: 4, kind: input, shape index: {}]
  %s5 = inlined_call_operand.hbm [shape: f32[16,128], index: 5, kind: output, shape index: {}]
  %s6 = sld [smem:[#allocation0]]
  $region42: #{tpu_custom_call.1} parent=0
    _
  %s8 = ssub.s32 1, %s6
  %s9 = scalar_select 0, %s8, %s6
  $region1: #{tpu_custom_call.1} parent=0
    #allocation2 [shape = 'u8[8192]{0}', space=vmem, size = 0x2000, scoped, tag = 'input window, operand 0, single buffered']
    #allocation3 [shape = 's32[1]{0}', space=sflag, size = 0x4, scoped, tag = 'scoped memory for tpu_custom_call.1']
    #allocation4 [shape = 's32[1]{0}', space=sflag, size = 0x4, scoped, tag = 'scoped memory for tpu_custom_call.1']
    #allocation5 [shape = 'u8[32768]{0}', space=vmem, size = 0x8000, scoped, tag = 'input window, operand 1, single buffered']
    #allocation6 [shape = 's32[1]{0}', space=sflag, size = 0x4, scoped, tag = 'scoped memory for tpu_custom_call.1']
    #allocation7 [shape = 'u8[32768]{0}', space=vmem, size = 0x8000, scoped, tag = 'input window, operand 3, single buffered']
    #allocation8 [shape = 'u8[8192]{0}', space=vmem, size = 0x2000, scoped, tag = 'output window, operand 0, single buffered']
    %10 = vsyncpa [#allocation3], 0
    %11 = vsyncpa [#allocation6], 0
    %12 = vsyncpa [#allocation4], 0
    // Predicated region
    $region2: #{tpu_custom_call.1} parent=1 // pred_check
      _
    $region3: #{tpu_custom_call.1} parent=1 // pred_check_branch
      %14 = sbr.rel (0) target = $region5
    $region4: #{tpu_custom_call.1} parent=1 // pred_region
      %16 = vsyncadd [#allocation3], 0
      %s17 = sshll.u32 %s0, 4
      %s18 = int_to_ptr.hbm [resolvable:$true] %s17
      %s19 = sshll.u32 [#allocation2], 4
      %s20 = int_to_ptr.vmem [resolvable:$true] %s19
      %25 = dma.hbm_to_vmem [thread:$0]  %s18, 256, %s20, [#allocation3], 128, 128, 8
    $region5: #{tpu_custom_call.1} parent=1 // pred_fallthru
      _
    // Predicated region
    $region6: #{tpu_custom_call.1} parent=1 // pred_check
      _
    $region7: #{tpu_custom_call.1} parent=1 // pred_check_branch
      %27 = sbr.rel (0) target = $region9
    $region8: #{tpu_custom_call.1} parent=1 // pred_region
      %29 = vsyncadd [#allocation6], 0
      %s30 = sshll.u32 %s1, 4
      %s31 = int_to_ptr.hbm [resolvable:$true] %s30
      %s32 = sshll.u32 [#allocation5], 4
      %s33 = int_to_ptr.vmem [resolvable:$true] %s32
      %38 = dma.hbm_to_vmem [thread:$0]  %s31, 1024, %s33, [#allocation6], 64, 64, 4
    $region9: #{tpu_custom_call.1} parent=1 // pred_fallthru
      _
    // Predicated region
    $region10: #{tpu_custom_call.1} parent=1 // pred_check
      _
    $region11: #{tpu_custom_call.1} parent=1 // pred_check_branch
      %40 = sbr.rel (0) target = $region13
    $region12: #{tpu_custom_call.1} parent=1 // pred_region
      _
    $region13: #{tpu_custom_call.1} parent=1 // pred_fallthru
      _
    // Predicated region
    $region14: #{tpu_custom_call.1} parent=1 // pred_check
      _
    $region15: #{tpu_custom_call.1} parent=1 // pred_check_branch
      %42 = sbr.rel (0) target = $region17
    $region16: #{tpu_custom_call.1} parent=1 // pred_region
      %44 = vsyncadd [#allocation6], 0
      %s45 = sshll.u32 %s3, 4
      %s46 = int_to_ptr.hbm [resolvable:$true] %s45
      %s47 = sshll.u32 [#allocation7], 4
      %s48 = int_to_ptr.vmem [resolvable:$true] %s47
      %53 = dma.hbm_to_vmem [thread:$0]  %s46, 1024, %s48, [#allocation6], 64, 64, 4
    $region17: #{tpu_custom_call.1} parent=1 // pred_fallthru
      _
    // Predicated region
    $region18: #{tpu_custom_call.1} parent=1 // pred_check
      _
    $region19: #{tpu_custom_call.1} parent=1 // pred_check_branch
      %55 = sbr.rel (0) target = $region21
    $region20: #{tpu_custom_call.1} parent=1 // pred_region
      _
    $region21: #{tpu_custom_call.1} parent=1 // pred_fallthru
      _
    // Predicated region
    $region22: #{tpu_custom_call.1} parent=1 // pred_check
      _
    $region23: #{tpu_custom_call.1} parent=1 // pred_check_branch
      %57 = sbr.rel (0) target = $region25
    $region24: #{tpu_custom_call.1} parent=1 // pred_region
      %59 = dma.done [#allocation3], 256
    $region25: #{tpu_custom_call.1} parent=1 // pred_fallthru
      _
    // Predicated region
    $region26: #{tpu_custom_call.1} parent=1 // pred_check
      _
    $region27: #{tpu_custom_call.1} parent=1 // pred_check_branch
      %61 = sbr.rel (0) target = $region29
    $region28: #{tpu_custom_call.1} parent=1 // pred_region
      %63 = dma.done [#allocation6], 1024
    $region29: #{tpu_custom_call.1} parent=1 // pred_fallthru
      _
    // Predicated region
    $region30: #{tpu_custom_call.1} parent=1 // pred_check
      _
    $region31: #{tpu_custom_call.1} parent=1 // pred_check_branch
      %65 = sbr.rel (0) target = $region33
    $region32: #{tpu_custom_call.1} parent=1 // pred_region
      %67 = dma.done [#allocation6], 1024
    $region33: #{tpu_custom_call.1} parent=1 // pred_fallthru
      _
    %v68 = vld [vmem:[#allocation5] sm:$0xf]
    %v69 = vld [vmem:[#allocation5 + $0x4] sm:$0xf]
    %v70 = vld [vmem:[#allocation5 + $0x8] sm:$0xf]
    %v71 = vld [vmem:[#allocation5 + $0xc] sm:$0xf]
    %v72 = vld [vmem:[#allocation5 + $0x10] sm:$0xf]
    %v73 = vld [vmem:[#allocation5 + $0x14] sm:$0xf]
    %v74 = vld [vmem:[#allocation5 + $0x18] sm:$0xf]
    %v75 = vld [vmem:[#allocation5 + $0x1c] sm:$0xf]
    %v76 = vld [vmem:[#allocation5 + $0x20] sm:$0xf]
    %v77 = vld [vmem:[#allocation5 + $0x24] sm:$0xf]
    %v78 = vld [vmem:[#allocation5 + $0x28] sm:$0xf]
    %v79 = vld [vmem:[#allocation5 + $0x2c] sm:$0xf]
    %v80 = vld [vmem:[#allocation5 + $0x30] sm:$0xf]
    %v81 = vld [vmem:[#allocation5 + $0x34] sm:$0xf]
    %v82 = vld [vmem:[#allocation5 + $0x38] sm:$0xf]
    %v83 = vld [vmem:[#allocation5 + $0x3c] sm:$0xf]
    %v84 = vld [vmem:[#allocation7] sm:$0xf]
    %v85 = vld [vmem:[#allocation7 + $0x4] sm:$0xf]
    %v86 = vld [vmem:[#allocation7 + $0x8] sm:$0xf]
    %v87 = vld [vmem:[#allocation7 + $0xc] sm:$0xf]
    %v88 = vld [vmem:[#allocation7 + $0x10] sm:$0xf]
    %v89 = vld [vmem:[#allocation7 + $0x14] sm:$0xf]
    %v90 = vld [vmem:[#allocation7 + $0x18] sm:$0xf]
    %v91 = vld [vmem:[#allocation7 + $0x1c] sm:$0xf]
    %v92 = vld [vmem:[#allocation7 + $0x20] sm:$0xf]
    %v93 = vld [vmem:[#allocation7 + $0x24] sm:$0xf]
    %v94 = vld [vmem:[#allocation7 + $0x28] sm:$0xf]
    %v95 = vld [vmem:[#allocation7 + $0x2c] sm:$0xf]
    %v96 = vld [vmem:[#allocation7 + $0x30] sm:$0xf]
    %v97 = vld [vmem:[#allocation7 + $0x34] sm:$0xf]
    %v98 = vld [vmem:[#allocation7 + $0x38] sm:$0xf]
    %v99 = vld [vmem:[#allocation7 + $0x3c] sm:$0xf]
    %v100 = vld [vmem:[%s2] sm:$0x1]
    %v101 = vld [vmem:[%s4] sm:$0x1]
    %v102 = vld [vmem:[#allocation2] sm:$0xff]
    %v103 = vld [vmem:[#allocation2 + $0x8] sm:$0xff]
    %v104 = vpack.c.bf16 %v103, %v102
    %v106 = vperm.slane %v100, 0
    %v124 = vunpack.c.l.b16 %v68
    %v125 = vunpack.c.l.b16 %v69
    %v126 = vunpack.c.l.b16 %v70
    %v127 = vunpack.c.l.b16 %v71
    %v128 = vunpack.c.l.b16 %v72
    %v129 = vunpack.c.l.b16 %v73
    %v130 = vunpack.c.l.b16 %v74
    %v131 = vunpack.c.l.b16 %v75
    %v132 = vunpack.c.l.b16 %v76
    %v133 = vunpack.c.l.b16 %v77
    %v134 = vunpack.c.l.b16 %v78
    %v135 = vunpack.c.l.b16 %v79
    %v136 = vunpack.c.l.b16 %v80
    %v137 = vunpack.c.l.b16 %v81
    %v138 = vunpack.c.l.b16 %v82
    %v139 = vunpack.c.l.b16 %v83
    %v140 = vpack.c.b16 %v125, %v124
    %v141 = vpack.c.b16 %v127, %v126
    %v142 = vpack.c.b16 %v129, %v128
    %v143 = vpack.c.b16 %v131, %v130
    %v144 = vpack.c.b16 %v133, %v132
    %v145 = vpack.c.b16 %v135, %v134
    %v146 = vpack.c.b16 %v137, %v136
    %v147 = vpack.c.b16 %v139, %v138
    %156 = vmatpush.bf16.msra.mxu0 %v147
    %157 = vmatpush.bf16.msra.mxu0 %v146
    %158 = vmatpush.bf16.msra.mxu0 %v145
    %159 = vmatpush.bf16.msra.mxu0 %v144
    %160 = vmatpush.bf16.msra.mxu0 %v143
    %161 = vmatpush.bf16.msra.mxu0 %v142
    %162 = vmatpush.bf16.msra.mxu0 %v141
    %163 = vmatpush.bf16.msra.mxu0 %v140
    %164 = vmatmul.bf16.gmra.mxu0 %v104
    %v165 = vpop.f32.mrf.mxu0
    %v166 = vadd.f32 %v106, %v165
    %v167 = vpop.f32.mrf.mxu0
    %v168 = vadd.f32 %v106, %v167
    %169 = vdwg.mxu0
    %v170 = vmul.f32 %v166, 0.5
    %v171 = vmul.f32 %v168, 0.5
    %v172 = vmul.f32 %v166, 0.70710677
    %v173 = vmul.f32 %v168, 0.70710677
    %v174 = vmul.f32 %v172, %v172
    %v175 = vmin.f32 16.0, %v174
    %v176 = vmul.f32 %v175, 2.1237322e-06
    %v177 = vadd.f32 %v176, 0.00028619796
    %v178 = vmul.f32 %v175, %v177
    %v179 = vadd.f32 %v178, 0.0036580483
    %v180 = vmul.f32 %v175, %v179
    %v181 = vadd.f32 %v180, 0.05243302
    %v182 = vmul.f32 %v175, %v181
    %v183 = vadd.f32 %v182, 0.18741608
    %v184 = vmul.f32 %v175, %v183
    %v185 = vadd.f32 %v184, 1.1283791
    %v186 = vmul.f32 %v172, %v185
    %v187 = vmul.f32 %v175, 3.8918573e-05
    %v188 = vadd.f32 %v187, 0.001143296
    %v189 = vmul.f32 %v175, %v188
    %v190 = vadd.f32 %v189, 0.014752088
    %v191 = vmul.f32 %v175, %v190
    %v192 = vadd.f32 %v191, 0.112945676
    %v193 = vmul.f32 %v175, %v192
    %v194 = vadd.f32 %v193, 0.4994258
    %v195 = vmul.f32 %v175, %v194
    %v196 = vadd.f32 %v195, 1.0
    %v197 = vrcp.pop %v196
    %v198 = vmul.f32 %v196, %v197
    %v199 = vsub.f32 1.0, %v198
    %v200 = vmul.f32 %v197, %v199
    %v201 = vadd.f32 %v197, %v200
    %vm202 = vweird.f32 %v196
    %vm203 = vweird.f32 %v197
    %vm204 = vmor %vm202, %vm203
    %v205 = vsel %vm204, %v197, %v201
    %v206 = vand.u32 2147483647, %v196
    %vm207 = vcmp.eq.f32.partialorder %v206, 8.507059e+37
    %v208 = vand.u32 %v196, 2147483648
    %v209 = vor.u32 1.1754944e-38, %v208
    %v210 = vsel %vm207, %v209, %v205
    %v211 = vmul.f32 %v186, %v210
    %v212 = vmin.f32 %v211, 1.0
    %v213 = vmax.f32 %v212, -1.0
    %v214 = vmul.f32 %v173, %v173
    %v215 = vmin.f32 16.0, %v214
    %v216 = vmul.f32 %v215, 2.1237322e-06
    %v217 = vadd.f32 %v216, 0.00028619796
    %v218 = vmul.f32 %v215, %v217
    %v219 = vadd.f32 %v218, 0.0036580483
    %v220 = vmul.f32 %v215, %v219
    %v221 = vadd.f32 %v220, 0.05243302
    %v222 = vmul.f32 %v215, %v221
    %v223 = vadd.f32 %v222, 0.18741608
    %v224 = vmul.f32 %v215, %v223
    %v225 = vadd.f32 %v224, 1.1283791
    %v226 = vmul.f32 %v173, %v225
    %v227 = vmul.f32 %v215, 3.8918573e-05
    %v228 = vadd.f32 %v227, 0.001143296
    %v229 = vmul.f32 %v215, %v228
    %v230 = vadd.f32 %v229, 0.014752088
    %v231 = vmul.f32 %v215, %v230
    %v232 = vadd.f32 %v231, 0.112945676
    %v233 = vmul.f32 %v215, %v232
    %v234 = vadd.f32 %v233, 0.4994258
    %v235 = vmul.f32 %v215, %v234
    %v236 = vadd.f32 %v235, 1.0
    %v237 = vrcp.pop %v236
    %v238 = vmul.f32 %v236, %v237
    %v239 = vsub.f32 1.0, %v238
    %v240 = vmul.f32 %v237, %v239
    %v241 = vadd.f32 %v237, %v240
    %vm242 = vweird.f32 %v236
    %vm243 = vweird.f32 %v237
    %vm244 = vmor %vm242, %vm243
    %v245 = vsel %vm244, %v237, %v241
    %v246 = vand.u32 2147483647, %v236
    %vm247 = vcmp.eq.f32.partialorder %v246, 8.507059e+37
    %v248 = vand.u32 %v236, 2147483648
    %v249 = vor.u32 1.1754944e-38, %v248
    %v250 = vsel %vm247, %v249, %v245
    %v251 = vmul.f32 %v226, %v250
    %v252 = vmin.f32 %v251, 1.0
    %v253 = vmax.f32 %v252, -1.0
    %v254 = vadd.f32 %v213, 1.0
    %v255 = vadd.f32 %v253, 1.0
    %v256 = vmul.f32 %v170, %v254
    %v257 = vmul.f32 %v171, %v255
    %v258 = vpack.c.bf16 %v257, %v256
    %v260 = vperm.slane %v101, 0
    %v278 = vunpack.c.l.b16 %v84
    %v279 = vunpack.c.l.b16 %v85
    %v280 = vunpack.c.l.b16 %v86
    %v281 = vunpack.c.l.b16 %v87
    %v282 = vunpack.c.l.b16 %v88
    %v283 = vunpack.c.l.b16 %v89
    %v284 = vunpack.c.l.b16 %v90
    %v285 = vunpack.c.l.b16 %v91
    %v286 = vunpack.c.l.b16 %v92
    %v287 = vunpack.c.l.b16 %v93
    %v288 = vunpack.c.l.b16 %v94
    %v289 = vunpack.c.l.b16 %v95
    %v290 = vunpack.c.l.b16 %v96
    %v291 = vunpack.c.l.b16 %v97
    %v292 = vunpack.c.l.b16 %v98
    %v293 = vunpack.c.l.b16 %v99
    %v294 = vpack.c.b16 %v279, %v278
    %v295 = vpack.c.b16 %v281, %v280
    %v296 = vpack.c.b16 %v283, %v282
    %v297 = vpack.c.b16 %v285, %v284
    %v298 = vpack.c.b16 %v287, %v286
    %v299 = vpack.c.b16 %v289, %v288
    %v300 = vpack.c.b16 %v291, %v290
    %v301 = vpack.c.b16 %v293, %v292
    %310 = vmatpush.bf16.msra.mxu0 %v301
    %311 = vmatpush.bf16.msra.mxu0 %v300
    %312 = vmatpush.bf16.msra.mxu0 %v299
    %313 = vmatpush.bf16.msra.mxu0 %v298
    %314 = vmatpush.bf16.msra.mxu0 %v297
    %315 = vmatpush.bf16.msra.mxu0 %v296
    %316 = vmatpush.bf16.msra.mxu0 %v295
    %317 = vmatpush.bf16.msra.mxu0 %v294
    %318 = vmatmul.bf16.gmra.mxu0 %v258
    %v319 = vpop.f32.mrf.mxu0
    %v320 = vadd.f32 %v260, %v319
    %v321 = vpop.f32.mrf.mxu0
    %v322 = vadd.f32 %v260, %v321
    %323 = vdwg.mxu0
    %324 = vst [vmem:[#allocation8] sm:$0xff] %v320
    %325 = vst [vmem:[#allocation8 + $0x8] sm:$0xff] %v322
    // Predicated region
    $region34: #{tpu_custom_call.1} parent=1 // pred_check
      _
    $region35: #{tpu_custom_call.1} parent=1 // pred_check_branch
      %327 = sbr.rel (0) target = $region37
    $region36: #{tpu_custom_call.1} parent=1 // pred_region
      %329 = vsyncadd [#allocation4], 0
      %s330 = sshll.u32 [#allocation8], 4
      %s331 = int_to_ptr.vmem [resolvable:$true] %s330
      %s332 = sshll.u32 %s5, 4
      %s333 = int_to_ptr.hbm [resolvable:$true] %s332
      %338 = dma.vmem_to_hbm [thread:$0]  %s331, 256, %s333, [#allocation4], 128, 128, 8
    $region37: #{tpu_custom_call.1} parent=1 // pred_fallthru
      _
    // Predicated region
    $region38: #{tpu_custom_call.1} parent=1 // pred_check
      _
    $region39: #{tpu_custom_call.1} parent=1 // pred_check_branch
      %340 = sbr.rel (0) target = $region41
    $region40: #{tpu_custom_call.1} parent=1 // pred_region
      %342 = dma.done [#allocation4], 256
    $region41: #{tpu_custom_call.1} parent=1 // pred_fallthru
      _
    %343 = vsyncpa [#allocation3], 1
    %344 = vsyncpa [#allocation6], 1
    %345 = vsyncpa [#allocation4], 1

</llo_original>
